<compile_context>
chip_gen: v6e
topology: v6e:2x2x1
jax: 0.10.0
libtpu: 0.0.40
codegen_flags: <defaults>
</compile_context>

<pallas_src>
import jax
import jax.numpy as jnp
from jax import lax
from jax.experimental import pallas as pl
from jax.experimental.pallas import tpu as pltpu


def inception_kernel(x_ref, w_ref, b_ref, out_ref):
    # x_ref : (1, L, C)        compute dtype (bf16)
    # w_ref : (6*C, OT_pad)    compute dtype (bf16), pre-packed branch weights
    # b_ref : (1, OT_pad)      f32 concatenated bias (zeros in padded cols)
    # out_ref: (1, L, OT_pad)  f32
    L = x_ref.shape[1]
    C = x_ref.shape[2]

    xl = x_ref[0]                                          # (L, C)
    zpad = jnp.zeros((2, C), xl.dtype)
    xz = jnp.concatenate([zpad, xl, zpad], axis=0)         # (L+4, C) zero halo

    # Five shifted views: taps[k][l] == x[l + k - 2] (zero outside [0, L)).
    taps = [xz[k:k + L, :] for k in range(5)]
    center = taps[2]

    # MaxPool1d(k=3, s=1, pad=1): at the boundary rows the pad element must
    # not participate, so substitute the (always valid) center element there.
    rows = lax.broadcasted_iota(jnp.int32, (L, C), 0)
    left = jnp.where(rows == 0, center, taps[1])
    right = jnp.where(rows == L - 1, center, taps[3])
    pooled = jnp.maximum(jnp.maximum(left, center), right)

    # Fused operand: (L, 6*C) = [x(l-2), x(l-1), x(l), x(l+1), x(l+2), pool(l)]
    operand = jnp.concatenate(taps + [pooled], axis=-1)

    acc = jnp.dot(operand, w_ref[...], preferred_element_type=jnp.float32)
    out_ref[0] = jnp.maximum(acc + b_ref[...], 0.0).astype(out_ref.dtype)


def _pack_weights(params_pt, compute_dtype):
    """Pack PyTorch-layout (O, I, K) conv weights into one (6*C, OT_pad) matrix
    matching the kernel operand layout, plus a (1, OT_pad) f32 bias."""
    (w1, b1), (w2, b2), (w3, b3), (w4, b4) = params_pt
    O1, O2, O3, O4 = w1.shape[0], w2.shape[0], w3.shape[0], w4.shape[0]
    C = w1.shape[1]
    OT = O1 + O2 + O3 + O4
    OT_pad = ((OT + 127) // 128) * 128

    W = jnp.zeros((6 * C, OT_pad), jnp.float32)
    # branch 1 (k=1): uses tap 2 (the center)
    W = W.at[2 * C:3 * C, 0:O1].set(jnp.transpose(w1[:, :, 0]))
    # branch 2 (k=3, pad=1): conv tap j hits x[l + j - 1]  ->  operand tap j+1
    for j in range(3):
        W = W.at[(j + 1) * C:(j + 2) * C, O1:O1 + O2].set(
            jnp.transpose(w2[:, :, j]))
    # branch 3 (k=5, pad=2): conv tap j hits x[l + j - 2]  ->  operand tap j
    for j in range(5):
        W = W.at[j * C:(j + 1) * C, O1 + O2:O1 + O2 + O3].set(
            jnp.transpose(w3[:, :, j]))
    # branch 4 (1x1 on maxpooled x): operand tap 5
    W = W.at[5 * C:6 * C, O1 + O2 + O3:OT].set(jnp.transpose(w4[:, :, 0]))

    b = jnp.zeros((1, OT_pad), jnp.float32)
    b = b.at[0, :OT].set(jnp.concatenate([b1, b2, b3, b4]))
    return W.astype(compute_dtype), b, OT, OT_pad


def naive_inception_block(x, params_pt, compute_dtype=jnp.bfloat16):
    """x: (N, C, L) float32 (PyTorch NCL).  params in PyTorch (O, I, K) layout.
    Returns (N, O1+O2+O3+O4, L) float32."""
    N, C, L = x.shape
    W, b, OT, OT_pad = _pack_weights(params_pt, compute_dtype)

    # glue: NCL -> NLC so channels sit on the 128-lane axis; single bf16 cast.
    xt = jnp.transpose(x, (0, 2, 1)).astype(compute_dtype)          # (N, L, C)

    act_bytes = N * L * C * jnp.dtype(compute_dtype).itemsize
    w_bytes = W.size * jnp.dtype(compute_dtype).itemsize + b.size * 4
    out_bytes = N * L * OT_pad * 4
    cost = pl.CostEstimate(
        flops=2 * N * L * (6 * C) * OT_pad,
        transcendentals=0,
        bytes_accessed=act_bytes + w_bytes + out_bytes,
    )

    out_nlc = pl.pallas_call(
        inception_kernel,
        out_shape=jax.ShapeDtypeStruct((N, L, OT_pad), jnp.float32),
        grid_spec=pltpu.PrefetchScalarGridSpec(
            num_scalar_prefetch=0,
            grid=(N,),
            in_specs=[
                pl.BlockSpec((1, L, C), lambda n: (n, 0, 0)),
                pl.BlockSpec((6 * C, OT_pad), lambda n: (0, 0)),
                pl.BlockSpec((1, OT_pad), lambda n: (0, 0)),
            ],
            out_specs=pl.BlockSpec((1, L, OT_pad), lambda n: (n, 0, 0)),
        ),
        compiler_params=pltpu.CompilerParams(
            dimension_semantics=("parallel",)),
        cost_estimate=cost,
    )(xt, W, b)

    out_nlc = out_nlc[..., :OT]                        # drop lane padding
    return jnp.transpose(out_nlc, (0, 2, 1))           # back to NCL


# ----------------------- pure-JAX reference (for checking) -----------------
def _conv1d_ref(x, w_oik, bias, pad):
    y = lax.conv_general_dilated(x, w_oik, window_strides=(1,),
                                 padding=((pad, pad),),
                                 dimension_numbers=("NCH", "OIH", "NCH"))
    return y + bias[None, :, None]


def reference_forward(x, params_pt):
    (w1, b1), (w2, b2), (w3, b3), (w4, b4) = params_pt
    r = jax.nn.relu
    y1 = r(_conv1d_ref(x, w1, b1, 0))
    y2 = r(_conv1d_ref(x, w2, b2, 1))
    y3 = r(_conv1d_ref(x, w3, b3, 2))
    pooled = lax.reduce_window(x, -jnp.inf, lax.max,
                               window_dimensions=(1, 1, 3),
                               window_strides=(1, 1, 1),
                               padding=((0, 0), (0, 0), (1, 1)))
    y4 = r(_conv1d_ref(pooled, w4, b4, 0))
    return jnp.concatenate([y1, y2, y3, y4], axis=1)


if __name__ == "__main__":
    key = jax.random.PRNGKey(0)
    N, C_in, L = 2, 4, 16
    O1, O2, O3, O4 = 4, 8, 4, 4

    keys = jax.random.split(key, 9)
    x = jax.random.normal(keys[0], (N, C_in, L), jnp.float32)

    # deterministic synthetic parameters in PyTorch (O, I, K) layout
    w1 = 0.1 * jax.random.normal(keys[1], (O1, C_in, 1), jnp.float32)
    w2 = 0.1 * jax.random.normal(keys[2], (O2, C_in, 3), jnp.float32)
    w3 = 0.1 * jax.random.normal(keys[3], (O3, C_in, 5), jnp.float32)
    w4 = 0.1 * jax.random.normal(keys[4], (O4, C_in, 1), jnp.float32)
    b1 = 0.1 * jax.random.normal(keys[5], (O1,), jnp.float32)
    b2 = 0.1 * jax.random.normal(keys[6], (O2,), jnp.float32)
    b3 = 0.1 * jax.random.normal(keys[7], (O3,), jnp.float32)
    b4 = 0.1 * jax.random.normal(keys[8], (O4,), jnp.float32)

    params_pt = ((w1, b1), (w2, b2), (w3, b3), (w4, b4))

    out = jax.block_until_ready(naive_inception_block(x, params_pt))
    ref = jax.block_until_ready(reference_forward(x, params_pt))

    assert out.shape == (N, O1 + O2 + O3 + O4, L), out.shape
    # bf16 matmul inputs (f32 accumulation) -> compare with bf16-level tolerance
    assert jnp.allclose(out, ref, atol=2e-2, rtol=2e-2), \
        f"max abs err {jnp.max(jnp.abs(out - ref))}"
    print("KERNEL_OK")
</pallas_src>

<mosaic_0001>
module attributes {stable_mosaic.version = 11 : i64} {
  func.func @inception_kernel(%arg0: i32, %arg1: memref<1x16x4xbf16, #tpu.memory_space<vmem>>, %arg2: memref<24x128xbf16, #tpu.memory_space<vmem>>, %arg3: memref<1x128xf32, #tpu.memory_space<vmem>>, %arg4: memref<1x16x128xf32, #tpu.memory_space<vmem>>) attributes {dimension_semantics = [#tpu.dimension_semantics<parallel>], iteration_bounds = array<i64: 2>, scalar_prefetch = 0 : i64, scratch_operands = 0 : i64, tpu.core_type = #tpu.core_type<tc>, window_params = [{transform_indices = @transform_0, window_bounds = array<i64: 1, 16, 4>}, {pipeline_mode = #tpu.pipeline_mode<synchronous>, transform_indices = @transform_1, window_bounds = array<i64: 24, 128>}, {pipeline_mode = #tpu.pipeline_mode<synchronous>, transform_indices = @transform_2, window_bounds = array<i64: 1, 128>}, {transform_indices = @transform_3, window_bounds = array<i64: 1, 16, 128>}]} {
    %c0 = arith.constant 0 : index
    %c0_0 = arith.constant 0 : index
    %c0_1 = arith.constant 0 : index
    %0 = vector.load %arg1[%c0, %c0_0, %c0_1] : memref<1x16x4xbf16, #tpu.memory_space<vmem>>, vector<1x16x4xbf16>
    %1 = vector.shape_cast %0 : vector<1x16x4xbf16> to vector<16x4xbf16>
    %cst = arith.constant 0.000000e+00 : bf16
    %2 = vector.broadcast %cst : bf16 to vector<2x4xbf16>
    %3 = tpu.concatenate %2, %1, %2 in 0 : vector<2x4xbf16>, vector<16x4xbf16>, vector<2x4xbf16> -> vector<20x4xbf16>
    %4 = vector.extract_strided_slice %3 {offsets = [0, 0], sizes = [16, 4], strides = [1, 1]} : vector<20x4xbf16> to vector<16x4xbf16>
    %5 = vector.extract_strided_slice %3 {offsets = [1, 0], sizes = [16, 4], strides = [1, 1]} : vector<20x4xbf16> to vector<16x4xbf16>
    %6 = vector.extract_strided_slice %3 {offsets = [2, 0], sizes = [16, 4], strides = [1, 1]} : vector<20x4xbf16> to vector<16x4xbf16>
    %7 = vector.extract_strided_slice %3 {offsets = [3, 0], sizes = [16, 4], strides = [1, 1]} : vector<20x4xbf16> to vector<16x4xbf16>
    %8 = vector.extract_strided_slice %3 {offsets = [4, 0], sizes = [16, 4], strides = [1, 1]} : vector<20x4xbf16> to vector<16x4xbf16>
    %9 = tpu.iota {dimensions = array<i32: 0>} : vector<16x4xi32>
    %c0_i32 = arith.constant 0 : i32
    %10 = vector.broadcast %c0_i32 : i32 to vector<16x4xi32>
    %11 = arith.cmpi eq, %9, %10 : vector<16x4xi32>
    %12 = arith.select %11, %6, %5 : vector<16x4xi1>, vector<16x4xbf16>
    %c15_i32 = arith.constant 15 : i32
    %13 = vector.broadcast %c15_i32 : i32 to vector<16x4xi32>
    %14 = arith.cmpi eq, %9, %13 : vector<16x4xi32>
    %15 = arith.select %14, %6, %7 : vector<16x4xi1>, vector<16x4xbf16>
    %16 = arith.maximumf %12, %6 : vector<16x4xbf16>
    %17 = arith.maximumf %16, %15 : vector<16x4xbf16>
    %18 = tpu.concatenate %4, %5, %6, %7, %8, %17 in 1 : vector<16x4xbf16>, vector<16x4xbf16>, vector<16x4xbf16>, vector<16x4xbf16>, vector<16x4xbf16>, vector<16x4xbf16> -> vector<16x24xbf16>
    %c0_2 = arith.constant 0 : index
    %c0_3 = arith.constant 0 : index
    %19 = vector.load %arg2[%c0_2, %c0_3] : memref<24x128xbf16, #tpu.memory_space<vmem>>, vector<24x128xbf16>
    %cst_4 = arith.constant dense<0.000000e+00> : vector<16x128xf32>
    %20 = tpu.matmul %18, %19, %cst_4 {dimension_numbers = #tpu.dot_dimension_numbers<[1], [0], [0], [1], [0, 0, 1, 1], [], []>} : vector<16x24xbf16>, vector<24x128xbf16>, vector<16x128xf32> -> vector<16x128xf32>
    %c0_5 = arith.constant 0 : index
    %c0_6 = arith.constant 0 : index
    %21 = vector.load %arg3[%c0_5, %c0_6] : memref<1x128xf32, #tpu.memory_space<vmem>>, vector<1x128xf32>
    %22 = vector.broadcast %21 : vector<1x128xf32> to vector<16x128xf32>
    %23 = arith.addf %20, %22 : vector<16x128xf32>
    %cst_7 = arith.constant 0.000000e+00 : f32
    %24 = vector.broadcast %cst_7 : f32 to vector<16x128xf32>
    %25 = arith.maximumf %23, %24 : vector<16x128xf32>
    %c0_8 = arith.constant 0 : index
    %c0_9 = arith.constant 0 : index
    %c0_10 = arith.constant 0 : index
    %26 = vector.load %arg4[%c0_8, %c0_9, %c0_10] : memref<1x16x128xf32, #tpu.memory_space<vmem>>, vector<1x16x128xf32>
    %27 = vector.shape_cast %26 : vector<1x16x128xf32> to vector<16x128xf32>
    %28 = vector.shape_cast %25 : vector<16x128xf32> to vector<1x16x128xf32>
    tpu.vector_store %arg4[%c0_8, %c0_9, %c0_10], %28 {strides = array<i32>} : memref<1x16x128xf32, #tpu.memory_space<vmem>>, vector<1x16x128xf32>,
    return
  }
  func.func @transform_0(%arg0: i32) -> (i32, i32, i32) {
    %c0_i32 = arith.constant 0 : i32
    %c0_i32_0 = arith.constant 0 : i32
    %c0_i32_1 = arith.constant 0 : i32
    return %arg0, %c0_i32, %c0_i32_0 : i32, i32, i32
  }
  func.func @transform_1(%arg0: i32) -> (i32, i32) {
    %c0_i32 = arith.constant 0 : i32
    %c0_i32_0 = arith.constant 0 : i32
    %c0_i32_1 = arith.constant 0 : i32
    return %c0_i32, %c0_i32_0 : i32, i32
  }
  func.func @transform_2(%arg0: i32) -> (i32, i32) {
    %c0_i32 = arith.constant 0 : i32
    %c0_i32_0 = arith.constant 0 : i32
    %c0_i32_1 = arith.constant 0 : i32
    return %c0_i32, %c0_i32_0 : i32, i32
  }
  func.func @transform_3(%arg0: i32) -> (i32, i32, i32) {
    %c0_i32 = arith.constant 0 : i32
    %c0_i32_0 = arith.constant 0 : i32
    %c0_i32_1 = arith.constant 0 : i32
    return %arg0, %c0_i32, %c0_i32_0 : i32, i32, i32
  }
}

</mosaic_0001>

<llo_original>
// kernel: tpu_custom_call.1
$region0: #{tpu_custom_call.1}
  #allocation0 [shape = 'u32[]', space=smem, size = 0x4, offset = 0x4, fixed_abs, tag = 'smem constant byte address 0x4 - core index']
  #allocation1 [shape = 'u32[144,128]{1,0:T(1,128)}', space=vmem, size = 0x12000, scoped, tag = 'internal scratch']
  %s0 = inlined_call_operand.vmem [shape: bf16[2,16,4], index: 0, kind: input, shape index: {}]
  %s1 = inlined_call_operand.vmem [shape: bf16[24,128], index: 1, kind: input, shape index: {}]
  %s2 = inlined_call_operand.vmem [shape: f32[1,128], index: 2, kind: input, shape index: {}]
  %s3 = inlined_call_operand.hbm [shape: f32[2,16,128], index: 3, kind: output, shape index: {}]
  %s4 = sld [smem:[#allocation0]]
  $region45: #{tpu_custom_call.1} parent=0
    _
  %s6 = ssub.s32 1, %s4
  %s7 = scalar_select 0, %s6, %s4
  $region1: #{tpu_custom_call.1} parent=0
    #allocation2 [shape = 'u8[16384]{0}', space=vmem, size = 0x4000, scoped, tag = 'output window, operand 0']
    #allocation3 [shape = 's32[2]{0}', space=sflag, size = 0x8, scoped, tag = 'scoped memory for tpu_custom_call.1']
    %8 = vsyncpa [#allocation3], 0
    %s9 = scalar_lea.sflag [#allocation3], 1
    %10 = vsyncpa %s9, 0
    loop: start=0, step=1, limit=4
    $region2: #{tpu_custom_call.1} parent=1 // loop_pre_header
      _
    $region3: #{tpu_custom_call.1} parent=1 // loop_header
      %s12 = sphi 0, %s16
      %p13 = scmp.ge.s32.totalorder %s12, 4
      %s22 = sphi 0, %s24
      %s25 = sphi 0, %s22
      %s26 = sphi 0, %s25
      %s42 = sphi 0, %s26
      %s46 = sphi 0, %s46
      %s48 = sphi 0, %s46
      %s49 = sphi 0, %s48
      %s63 = sphi 0, %s49
      %s67 = sphi 0, %s67
      %s69 = sphi 0, %s67
      %s70 = sphi 0, %s69
      %s84 = sphi 0, %s70
      %s90 = sphi 0, %s92
      %s93 = sphi 0, %s90
      %s94 = sphi 0, %s93
      %s110 = sphi 0, %s94
    $region4: #{tpu_custom_call.1} parent=1 // loop_header_branch
      %15 = sbr.rel (%p13) target = $region8
    $region5: #{tpu_custom_call.1} parent=1 // loop_body
      %s17 = ssub.s32 %s12, 1
      %s18 = ssub.s32 %s12, 2
      %s19 = sadd.s32 %s12, 1
      %s20 = ssub.s32 %s12, %s19
      %p21 = scmp.eq.s32.totalorder %s20, 0
      %s23 = sadd.s32 %s22, 1
      %s24 = scalar_select %p21, %s22, %s23
      %p27 = pneg %p21
      %p28 = scmp.eq.s32.totalorder %s12, 1
      %p29 = por %p27, %p28
      %p30 = scmp.ne.s32.totalorder %s22, %s25
      %p31 = scmp.eq.s32.totalorder %s12, 0
      %p32 = por %p30, %p31
      %p33 = scmp.ne.s32.totalorder %s22, %s25
      %p34 = scmp.eq.s32.totalorder %s17, 1
      %p35 = por %p33, %p34
      %p36 = scmp.ne.s32.totalorder %s25, %s26
      %p37 = scmp.eq.s32.totalorder %s17, 0
      %p38 = por %p36, %p37
      %p39 = scmp.ne.s32.totalorder %s25, %s26
      %p40 = scmp.eq.s32.totalorder %s18, 1
      %p41 = por %p39, %p40
      %p43 = scmp.ne.s32.totalorder %s26, %s42
      %p44 = scmp.eq.s32.totalorder %s18, 0
      %p45 = por %p43, %p44
      %s47 = sadd.s32 %s46, 1
      %p50 = scmp.eq.s32.totalorder %s12, 1
      %p51 = scmp.ne.s32.totalorder %s46, %s48
      %p52 = scmp.eq.s32.totalorder %s12, 0
      %p53 = por %p51, %p52
      %p54 = scmp.ne.s32.totalorder %s46, %s48
      %p55 = scmp.eq.s32.totalorder %s17, 1
      %p56 = por %p54, %p55
      %p57 = scmp.ne.s32.totalorder %s48, %s49
      %p58 = scmp.eq.s32.totalorder %s17, 0
      %p59 = por %p57, %p58
      %p60 = scmp.ne.s32.totalorder %s48, %s49
      %p61 = scmp.eq.s32.totalorder %s18, 1
      %p62 = por %p60, %p61
      %p64 = scmp.ne.s32.totalorder %s49, %s63
      %p65 = scmp.eq.s32.totalorder %s18, 0
      %p66 = por %p64, %p65
      %s68 = sadd.s32 %s67, 1
      %p71 = scmp.eq.s32.totalorder %s12, 1
      %p72 = scmp.ne.s32.totalorder %s67, %s69
      %p73 = scmp.eq.s32.totalorder %s12, 0
      %p74 = por %p72, %p73
      %p75 = scmp.ne.s32.totalorder %s67, %s69
      %p76 = scmp.eq.s32.totalorder %s17, 1
      %p77 = por %p75, %p76
      %p78 = scmp.ne.s32.totalorder %s69, %s70
      %p79 = scmp.eq.s32.totalorder %s17, 0
      %p80 = por %p78, %p79
      %p81 = scmp.ne.s32.totalorder %s69, %s70
      %p82 = scmp.eq.s32.totalorder %s18, 1
      %p83 = por %p81, %p82
      %p85 = scmp.ne.s32.totalorder %s70, %s84
      %p86 = scmp.eq.s32.totalorder %s18, 0
      %p87 = por %p85, %p86
      %s88 = ssub.s32 %s12, %s19
      %p89 = scmp.eq.s32.totalorder %s88, 0
      %s91 = sadd.s32 %s90, 1
      %s92 = scalar_select %p89, %s90, %s91
      %p95 = pneg %p89
      %p96 = scmp.eq.s32.totalorder %s12, 1
      %p97 = por %p95, %p96
      %p98 = scmp.ne.s32.totalorder %s90, %s93
      %p99 = scmp.eq.s32.totalorder %s12, 0
      %p100 = por %p98, %p99
      %p101 = scmp.ne.s32.totalorder %s90, %s93
      %p102 = scmp.eq.s32.totalorder %s17, 1
      %p103 = por %p101, %p102
      %p104 = scmp.ne.s32.totalorder %s93, %s94
      %p105 = scmp.eq.s32.totalorder %s17, 0
      %p106 = por %p104, %p105
      %p107 = scmp.ne.s32.totalorder %s93, %s94
      %p108 = scmp.eq.s32.totalorder %s18, 1
      %p109 = por %p107, %p108
      %p111 = scmp.ne.s32.totalorder %s94, %s110
      %p112 = scmp.eq.s32.totalorder %s18, 0
      %p113 = por %p111, %p112
      %p114 = scmp.le.s32.totalorder 1, %s12
      %p115 = scmp.lt.s32.totalorder %s12, 3
      %p116 = pnand %p114, %p115
      %p117 = pneg %p116
      // Predicated region
      $region9: #{tpu_custom_call.1} parent=5 // pred_check
        _
      $region10: #{tpu_custom_call.1} parent=5 // pred_check_branch
        %119 = sbr.rel (%p116) target = $region12
      $region11: #{tpu_custom_call.1} parent=5 // pred_region
        %s120 = ssub.s32 %s12, 1
        // Predicated region
        $region13: #{tpu_custom_call.1} parent=11 // pred_check
          %p121 = pneg %p59
        $region14: #{tpu_custom_call.1} parent=11 // pred_check_branch
          %123 = sbr.rel (%p121) target = $region16
        $region15: #{tpu_custom_call.1} parent=11 // pred_region
          _
        $region16: #{tpu_custom_call.1} parent=11 // pred_fallthru
          _
        // Predicated region
        $region17: #{tpu_custom_call.1} parent=11 // pred_check
          %p124 = pneg %p80
        $region18: #{tpu_custom_call.1} parent=11 // pred_check_branch
          %126 = sbr.rel (%p124) target = $region20
        $region19: #{tpu_custom_call.1} parent=11 // pred_region
          _
        $region20: #{tpu_custom_call.1} parent=11 // pred_fallthru
          _
      $region12: #{tpu_custom_call.1} parent=5 // pred_fallthru
        _
      %p127 = scmp.lt.s32.totalorder %s12, 2
      // Predicated region
      $region21: #{tpu_custom_call.1} parent=5 // pred_check
        %p128 = pneg %p127
      $region22: #{tpu_custom_call.1} parent=5 // pred_check_branch
        %130 = sbr.rel (%p128) target = $region24
      $region23: #{tpu_custom_call.1} parent=5 // pred_region
        // Predicated region
        $region25: #{tpu_custom_call.1} parent=23 // pred_check
          %p131 = pneg %p32
        $region26: #{tpu_custom_call.1} parent=23 // pred_check_branch
          %133 = sbr.rel (%p131) target = $region28
        $region27: #{tpu_custom_call.1} parent=23 // pred_region
          %p134 = scmp.lt.s32.totalorder %s12, 1
          %s135 = scalar_select %p134, %s12, 1
          %s136 = smul.addr %s135, 2
          %s137 = smul.addr %s136, 4
          %s138 = scalar_lea.vmem %s0, %s137
        $region28: #{tpu_custom_call.1} parent=23 // pred_fallthru
          _
      $region24: #{tpu_custom_call.1} parent=5 // pred_fallthru
        _
      %p139 = scmp.le.s32.totalorder 1, %s12
      %p140 = scmp.lt.s32.totalorder %s12, 3
      %p141 = pnand %p139, %p140
      %p142 = pneg %p141
      // Predicated region
      $region29: #{tpu_custom_call.1} parent=5 // pred_check
        _
      $region30: #{tpu_custom_call.1} parent=5 // pred_check_branch
        %144 = sbr.rel (%p141) target = $region32
      $region31: #{tpu_custom_call.1} parent=5 // pred_region
        %s145 = ssub.s32 %s12, 1
        %p146 = scmp.lt.s32.totalorder %s17, 1
        %s147 = scalar_select %p146, %s17, 1
        %s148 = smul.addr %s147, 2
        %s149 = smul.addr %s148, 4
        %s150 = scalar_lea.vmem %s0, %s149
        %p151 = pneg %p38
        %p152 = pneg %p35
        %p153 = pneg %p59
        %p154 = pneg %p56
        %p155 = pneg %p80
        %p156 = pneg %p77
        %p157 = pneg %p106
        %p158 = pneg %p103
        %s159 = sand.u32 %s93, 1
        %s160 = scalar_lea.sflag [#allocation3], %s159
        %s161 = sand.u32 %s93, 1
        %s162 = smul.addr %s161, 16
        %s163 = scalar_lea.vmem [#allocation2], %s162
        %p164 = scmp.lt.s32.totalorder %s17, 1
        %s165 = scalar_select %p164, %s17, 1
        %s166 = smul.addr %s165, 2
        %s167 = smul.addr %s166, 4
        %s168 = scalar_lea.vmem %s0, %s167
        %v172 = vld [vmem:[%s168] sm:$0xf]
        %v173 = vld [vmem:[%s168 + $0x4] sm:$0xf]
        %v176 = vunpack.c.l.b16 %v172
        %v177 = vunpack.c.l.b16 %v173
        %v178 = vpack.c.b16 %v177, %v176
        %v179 = vrot.slane %v178, 7
        %vm180 = vcmask 1040384
        %v183 = vsel %vm180, 0, %v179
        %v185 = vsel %vm180, %v179, 0
        %v187 = vlaneseq
        %v188 = vshrl.u32 %v187, 7
        %v189 = vadd.s32 %v188, 8
        %vm190 = vcmp.eq.s32.totalorder %v188, 0
        %vm191 = vcmp.eq.s32.totalorder %v189, 0
        %vm192 = vmpackc.low %vm190, %vm190
        %vm193 = vmpackc.low %vm191, %vm191
        %v194 = vsel %vm192, 65537, 0
        %v195 = vsel %vm193, 65537, 0
        %v196 = vunpack.c.l.b16 %v194
        %v197 = vunpack.c.l.b16 %v195
        %v198 = vpack.c.b16 %v197, %v196
        %v199 = vrot.slane %v198, 7
        %vm200 = vcmp.ne.s16.totalorder %v199, 0
        %vm201 = vsmask.f32 256
        %v202 = vshrl.u32 %v183, 16
        %v204 = vrot.slane %v202, 7
        %v205 = vshll.u32 %v183, 16
        %v207 = vor.u32 %v204, %v205
        %v208 = vshll.u32 %v185, 16
        %v210 = vsel %vm201, %v204, %v208
        %v213 = vsel %vm200, %v183, %v207
        %v214 = vsel %vm200, %v185, %v210
        %vm215 = vcmp.eq.s32.totalorder %v188, 15
        %vm216 = vcmp.eq.s32.totalorder %v189, 15
        %vm217 = vmpackc.low %vm215, %vm215
        %vm218 = vmpackc.low %vm216, %vm216
        %v219 = vsel %vm217, 65537, 0
        %v220 = vsel %vm218, 65537, 0
        %v221 = vunpack.c.l.b16 %v219
        %v222 = vunpack.c.l.b16 %v220
        %v223 = vpack.c.b16 %v222, %v221
        %v224 = vrot.slane %v223, 7
        %vm225 = vcmp.ne.s16.totalorder %v224, 0
        %vm226 = vsmask.f32 7424
        %v227 = vrot.slane %v205, 1
        %v228 = vor.u32 %v202, %v227
        %v229 = vrot.slane %v208, 1
        %v230 = vsel %vm226, %v228, %v229
        %v231 = vshrl.u32 %v185, 16
        %v233 = vor.u32 %v231, %v229
        %v236 = vsel %vm225, %v183, %v230
        %v237 = vsel %vm225, %v185, %v233
        %v238 = vmax.bf16 %v213, %v183
        %v239 = vmax.bf16 %v214, %v185
        %v240 = vmax.bf16 %v238, %v236
        %v241 = vmax.bf16 %v239, %v237
        %242 = vrot.lane.b32.xlu0 %v230, 4
        %v243 = vpop.permute.xlu0 %242
        %vm246 = vcmask 1046528
        %v247 = vrot.slane %v183, 1
        %v248 = vrot.slane %v185, 1
        %v249 = vsel %vm246, %v247, %v248
        %250 = vrot.lane.b32.xlu0 %v249, 8
        %v251 = vpop.permute.xlu0 %250
        %vm252 = vsmask.f32 6400
        %v253 = vrot.slane %v202, 1
        %v254 = vrot.slane %v205, 2
        %v255 = vor.u32 %v253, %v254
        %v256 = vrot.slane %v231, 1
        %v257 = vrot.slane %v208, 2
        %v258 = vor.u32 %v256, %v257
        %v259 = vsel %vm252, %v255, %v258
        %260 = vrot.lane.b32.xlu0 %v259, 12
        %v261 = vpop.permute.xlu0 %260
        %vm262 = vcmask 1045504
        %v263 = vrot.slane %v183, 2
        %v264 = vrot.slane %v185, 2
        %v265 = vsel %vm262, %v263, %v264
        %266 = vrot.lane.b32.xlu0 %v265, 16
        %v267 = vpop.permute.xlu0 %266
        %v270 = vrot.slane %v240, 1
        %v271 = vrot.slane %v241, 1
        %v272 = vsel %vm246, %v270, %v271
        %273 = vrot.lane.b32.xlu0 %v272, 20
        %v274 = vpop.permute.xlu0 %273
        %vm275 = vcmask 31744
        %v277 = vsel %vm275, %v183, %v243
        %vm278 = vcmask 64512
        %v280 = vsel %vm278, %v277, %v251
        %vm281 = vcmask 97280
        %v283 = vsel %vm281, %v280, %v261
        %vm284 = vcmask 130048
        %v286 = vsel %vm284, %v283, %v267
        %vm287 = vcmask 162816
        %v289 = vsel %vm287, %v286, %v274
        %v290 = vld [vmem:[%s1] sm:$0xf]
        %v291 = vld [vmem:[%s1 + $0x4] sm:$0xf]
        %v292 = vld [vmem:[%s1 + $0x8] sm:$0xf]
        %v293 = vld [vmem:[%s2] sm:$0x1]
        %v295 = vlaneseq
        %v296 = vshrl.u32 %v295, 7
        %v297 = vsub.s32 0, %v296
        %v298 = vrot.slane %v293, %v297
        %v303 = vunpack.c.l.b16 %v290
        %v304 = vunpack.c.l.b16 %v291
        %v305 = vunpack.c.l.b16 %v292
        %v306 = vpack.c.b16 %v304, %v303
        %v307 = vpack.c.b16 %v305, %v305
        %vm309 = vcmask 195584
        %v310 = vsel %vm309, %v289, 0
        %vm312 = vcmask 1043456
        %v314 = vsel %vm312, %v307, 0
        %316 = vmatprep.subr.bf16.mxu0 0
        %317 = vmatpush1.bf16.msra.mxu0 0
        %318 = vmatprep.subr.bf16.mxu0 0
        %319 = vmatpush1.bf16.msra.mxu0 0
        %320 = vmatprep.subr.bf16.mxu0 0
        %321 = vmatpush1.bf16.msra.mxu0 0
        %322 = vmatprep.subr.bf16.mxu0 0
        %323 = vmatpush1.bf16.msra.mxu0 0
        %324 = vmatprep.subr.bf16.mxu0 0
        %325 = vmatpush1.bf16.msra.mxu0 0
        %326 = vmatprep.subr.bf16.mxu0 0
        %327 = vmatpush1.bf16.msra.mxu0 0
        %328 = vmatprep.subr.bf16.mxu0 0
        %329 = vmatpush1.bf16.msra.mxu0 %v314
        %330 = vmatprep.subr.bf16.mxu0 0
        %331 = vmatpush1.bf16.msra.mxu0 %v306
        %332 = vmatprep.subr.bf16.mxu0 0
        %333 = vmatpush2.bf16.msra.mxu0 0
        %334 = vmatprep.subr.bf16.mxu0 0
        %335 = vmatpush2.bf16.msra.mxu0 0
        %336 = vmatprep.subr.bf16.mxu0 0
        %337 = vmatpush2.bf16.msra.mxu0 0
        %338 = vmatprep.subr.bf16.mxu0 0
        %339 = vmatpush2.bf16.msra.mxu0 0
        %340 = vmatprep.subr.bf16.mxu0 0
        %341 = vmatpush2.bf16.msra.mxu0 0
        %342 = vmatprep.subr.bf16.mxu0 0
        %343 = vmatpush2.bf16.msra.mxu0 0
        %344 = vmatprep.subr.bf16.mxu0 0
        %345 = vmatpush2.bf16.msra.mxu0 0
        %346 = vmatprep.subr.bf16.mxu0 0
        %347 = vmatpush2.bf16.msra.mxu0 0
        %348 = vmatprep.mubr.bf16.mxu0 0
        %349 = vmatmul.mubr.bf16.gmra.mxu0 %v310
        %v350 = vpop.f32.mrf.mxu0
        %v351 = vadd.f32 %v298, %v350
        %v352 = vpop.f32.mrf.mxu0
        %v353 = vpop.f32.mrf.mxu0
        %v354 = vadd.f32 %v298, %v353
        %v355 = vpop.f32.mrf.mxu0
        %356 = vdwg.mxu0
        %v357 = vmax.f32 %v351, 0.0
        %v358 = vmax.f32 %v354, 0.0
        %359 = vst [vmem:[%s163] sm:$0xff] %v357
        %360 = vst [vmem:[%s163 + $0x8] sm:$0xff] %v358
        %s361 = sand.u32 %s93, 1
        %s362 = scalar_lea.sflag [#allocation3], %s361
        %s363 = sand.u32 %s93, 1
        %s364 = smul.addr %s363, 16
        %s365 = scalar_lea.vmem [#allocation2], %s364
        // Predicated region
        $region33: #{tpu_custom_call.1} parent=31 // pred_check
          %p366 = pneg %p103
        $region34: #{tpu_custom_call.1} parent=31 // pred_check_branch
          %368 = sbr.rel (%p366) target = $region36
        $region35: #{tpu_custom_call.1} parent=31 // pred_region
          %s370 = ssub.s32 256, 256
          %371 = vsyncadd %s362, %s370
          %s372 = smul.addr %s17, 2
          %s373 = smul.addr %s372, 128
          %s374 = scalar_lea.hbm %s3, %s373
          %s375 = sshll.u32 %s365, 4
          %s376 = int_to_ptr.vmem [resolvable:$true] %s375
          %381 = dma.vmem_to_hbm [thread:$0]  %s376, 256, %s374, %s362, 128, 128, 8
        $region36: #{tpu_custom_call.1} parent=31 // pred_fallthru
          _
      $region32: #{tpu_custom_call.1} parent=5 // pred_fallthru
        _
      %p382 = scmp.le.s32.totalorder 2, %s12
      // Predicated region
      $region37: #{tpu_custom_call.1} parent=5 // pred_check
        %p383 = pneg %p382
      $region38: #{tpu_custom_call.1} parent=5 // pred_check_branch
        %385 = sbr.rel (%p383) target = $region40
      $region39: #{tpu_custom_call.1} parent=5 // pred_region
        %s386 = ssub.s32 %s12, 2
        // Predicated region
        $region41: #{tpu_custom_call.1} parent=39 // pred_check
          %p387 = pneg %p109
        $region42: #{tpu_custom_call.1} parent=39 // pred_check_branch
          %389 = sbr.rel (%p387) target = $region44
        $region43: #{tpu_custom_call.1} parent=39 // pred_region
          %s390 = sand.u32 %s94, 1
          %s391 = scalar_lea.sflag [#allocation3], %s390
          %s392 = sand.u32 %s94, 1
          %s393 = smul.addr %s392, 16
          %s394 = scalar_lea.vmem [#allocation2], %s393
          %395 = dma.done %s391, 256
        $region44: #{tpu_custom_call.1} parent=39 // pred_fallthru
          _
      $region40: #{tpu_custom_call.1} parent=5 // pred_fallthru
        _
    $region6: #{tpu_custom_call.1} parent=1 // loop_footer
      %s16 = sadd.s32 1, %s12
    $region7: #{tpu_custom_call.1} parent=1 // loop_footer_branch
      %11 = sbr.rel target = $region3
    $region8: #{tpu_custom_call.1} parent=1 // loop_exit
      _
    %396 = vsyncpa [#allocation3], 1
    %s397 = scalar_lea.sflag [#allocation3], 1
    %398 = vsyncpa %s397, 1

</llo_original>
